<compile_context>
chip_gen: v7x
topology: tpu7x:2x2x1
jax: 0.10.0
libtpu: 0.0.40
codegen_flags: <defaults>
</compile_context>

<pallas_src>
import functools

import jax
import jax.numpy as jnp
from jax.experimental import pallas as pl
from jax.experimental.pallas import tpu as pltpu


def _round_up(x, m):
    return (x + m - 1) // m * m


def _pad2(a, rows, cols):
    return jnp.pad(a, ((0, rows - a.shape[0]), (0, cols - a.shape[1])))


def _vmem_cap_bytes():
    """Per-generation scoped-VMEM ceiling (128 MiB v5e/v6e, 64 MiB/TC v7x)."""
    try:
        return int(pltpu.get_tpu_info().vmem_capacity_bytes)
    except Exception:
        return 64 * 1024 * 1024  # conservative fallback (v7x per-TC)


def _resident_spec(block_shape):
    """Grid-invariant block: single-buffered if the API supports it."""
    index_map = lambda i: (0, 0)
    if hasattr(pl, "Buffered"):
        try:
            return pl.BlockSpec(block_shape, index_map,
                                pipeline_mode=pl.Buffered(1))
        except TypeError:
            pass
    return pl.BlockSpec(block_shape, index_map)


def minlstm_kernel(x_ref, h_ref, w_ref, b_ref, out_ref, *, u_pad, approx_recip):
    # One fused MXU matmul: (TB, D8) @ (D8, 3*Up) -> (TB, 3*Up), f32 accum,
    # plus one broadcast bias add.
    z = jnp.dot(x_ref[...], w_ref[...],
                preferred_element_type=jnp.float32) + b_ref[...]

    # Lane-aligned static slices (u_pad is a multiple of 128).
    f_t = jax.nn.sigmoid(z[:, 0 * u_pad:1 * u_pad])
    i_t = jax.nn.sigmoid(z[:, 1 * u_pad:2 * u_pad])
    tilde_h = z[:, 2 * u_pad:3 * u_pad]

    # Guard 0/0 when both gates underflow to exactly 0 in f32.
    s = jnp.maximum(f_t + i_t, 1e-30)
    if approx_recip:
        # EUP approx reciprocal + one Newton step -> ~f32 accuracy, no divide.
        inv = pl.reciprocal(s, approx=True)
        inv = inv * (2.0 - s * inv)
    else:
        inv = 1.0 / s  # exact parity path

    f_p = f_t * inv
    i_p = i_t * inv
    out_ref[...] = (f_p * h_ref[...] + i_p * tilde_h).astype(out_ref.dtype)


def prepare_min_lstm_params(w_f, b_f, w_i, b_i, w_h, b_h,
                            *, compute_dtype=jnp.bfloat16):
    """One-time fuse/pad/cast of the three linears.

    Returns (w_all, b_all): w_all is (D8, 3*Up) compute_dtype, b_all is
    (1, 3*Up) f32, where D8 = round_up(D, 8) and Up = round_up(U, 128).
    Hoist this out of any per-timestep loop.
    """
    D, U = w_f.shape
    D8 = _round_up(D, 8)      # minimal sublane-friendly pad (NOT 128)
    Up = _round_up(U, 128)    # lane-dense per-gate block
    w_all = jnp.concatenate(
        [_pad2(w.astype(compute_dtype), D8, Up) for w in (w_f, w_i, w_h)], axis=1)
    b_all = jnp.concatenate(
        [_pad2(b.astype(jnp.float32), 1, Up) for b in (b_f, b_i, b_h)], axis=1)
    return w_all, b_all


def min_lstm_cell_fused(pre_h, x_t, w_all, b_all, *, units, block_b=256,
                        out_dtype=jnp.float32, approx_recip=True):
    """pre_h: (B, U), x_t: (B, D), pre-fused w_all/b_all -> (B, U) out_dtype."""
    B, D = x_t.shape
    U = units
    D8, three_up = w_all.shape
    Up = three_up // 3
    cdtype = w_all.dtype

    # ---- batch tiling -------------------------------------------------------
    Bp = _round_up(B, 8)
    TB = max(8, min(_round_up(block_b, 8), Bp))
    # Guarantee >= 2 batch tiles when possible (v7x megacore + pipeline overlap).
    if Bp >= 16:
        TB = min(TB, _round_up(Bp // 2, 8))

    x_item = jnp.dtype(cdtype).itemsize
    out_item = jnp.dtype(out_dtype).itemsize

    def vmem_needed(tb):
        return (D8 * three_up * x_item        # resident fused weight (1 buffer)
                + three_up * 4                # resident fused bias (f32)
                + 2 * tb * D8 * x_item        # x tiles, double-buffered
                + 2 * tb * Up * 4             # pre_h tiles (f32), double-buffered
                + 2 * tb * Up * out_item      # out tiles, double-buffered
                + tb * three_up * 4           # z = x@W + b intermediate (f32)
                + 3 * tb * Up * 4             # f_t / i_t / gate temporaries
                + (2 << 20))                  # headroom

    cap = _vmem_cap_bytes()
    while TB > 8 and vmem_needed(TB) > cap - (4 << 20):
        TB = _round_up(max(8, TB // 2), 8)

    Bp = _round_up(Bp, TB)
    grid = (Bp // TB,)
    vmem_limit = int(min(cap, max(32 << 20, vmem_needed(TB) + (2 << 20))))

    # ---- pad activations ----------------------------------------------------
    x_p = _pad2(x_t.astype(cdtype), Bp, D8)
    h_p = _pad2(pre_h.astype(jnp.float32), Bp, Up)

    out_p = pl.pallas_call(
        functools.partial(minlstm_kernel, u_pad=Up, approx_recip=approx_recip),
        out_shape=jax.ShapeDtypeStruct((Bp, Up), out_dtype),
        grid=grid,
        in_specs=[
            pl.BlockSpec((TB, D8), lambda i: (i, 0)),   # x batch tile
            pl.BlockSpec((TB, Up), lambda i: (i, 0)),   # pre_h batch tile
            _resident_spec((D8, three_up)),             # fused W, VMEM-resident
            _resident_spec((1, three_up)),              # fused b, VMEM-resident
        ],
        out_specs=pl.BlockSpec((TB, Up), lambda i: (i, 0)),
        compiler_params=pltpu.CompilerParams(
            dimension_semantics=("parallel",),
            vmem_limit_bytes=vmem_limit),
    )(x_p, h_p, w_all, b_all)

    return out_p[:B, :U]


def min_lstm_cell(pre_h, x_t, w_f, b_f, w_i, b_i, w_h, b_h, *, block_b=256,
                  compute_dtype=jnp.bfloat16, out_dtype=jnp.float32,
                  approx_recip=True):
    """Convenience single-call wrapper (fuses params on the fly)."""
    w_all, b_all = prepare_min_lstm_params(
        w_f, b_f, w_i, b_i, w_h, b_h, compute_dtype=compute_dtype)
    return min_lstm_cell_fused(pre_h, x_t, w_all, b_all, units=pre_h.shape[1],
                               block_b=block_b, out_dtype=out_dtype,
                               approx_recip=approx_recip)


def min_lstm_cell_ref(pre_h, x_t, w_f, b_f, w_i, b_i, w_h, b_h):
    """Pure-JAX reference (exact divides), matches the PyTorch forward."""
    f_t = jax.nn.sigmoid(x_t @ w_f + b_f)
    i_t = jax.nn.sigmoid(x_t @ w_i + b_i)
    tilde_h = x_t @ w_h + b_h
    s = f_t + i_t
    return (f_t / s) * pre_h + (i_t / s) * tilde_h


if __name__ == "__main__":
    batch = 2
    input_size = 16
    units = 32

    key = jax.random.PRNGKey(0)
    keys = jax.random.split(key, 8)

    x_t = jax.random.normal(keys[0], (batch, input_size), dtype=jnp.float32)
    pre_h = jax.random.normal(keys[1], (batch, units), dtype=jnp.float32)

    # Deterministic parameter init (shapes follow nn.Linear(input_size, units)),
    # stored transposed so the kernel computes x @ W + b.
    scale = 1.0 / jnp.sqrt(jnp.float32(input_size))
    w_f = jax.random.uniform(keys[2], (input_size, units), jnp.float32, -scale, scale)
    w_i = jax.random.uniform(keys[3], (input_size, units), jnp.float32, -scale, scale)
    w_h = jax.random.uniform(keys[4], (input_size, units), jnp.float32, -scale, scale)
    b_f = jax.random.uniform(keys[5], (1, units), jnp.float32, -scale, scale)
    b_i = jax.random.uniform(keys[6], (1, units), jnp.float32, -scale, scale)
    b_h = jax.random.uniform(keys[7], (1, units), jnp.float32, -scale, scale)

    h_ref = min_lstm_cell_ref(pre_h, x_t, w_f, b_f, w_i, b_i, w_h, b_h)

    # 1) Exact parity path: f32 MXU inputs + exact divide (matches PyTorch).
    h_exact = min_lstm_cell(pre_h, x_t, w_f, b_f, w_i, b_i, w_h, b_h,
                            compute_dtype=jnp.float32, approx_recip=False)
    h_exact = jax.block_until_ready(h_exact)
    assert h_exact.shape == (batch, units)
    assert jnp.allclose(h_exact, h_ref, atol=1e-4, rtol=1e-4), (
        float(jnp.max(jnp.abs(h_exact - h_ref))))

    # 2) Default fast path: bf16 MXU inputs (f32 accum) + Newton-refined EUP
    #    reciprocal.  Tolerance reflects bf16 input rounding only.
    h_fast = min_lstm_cell(pre_h, x_t, w_f, b_f, w_i, b_i, w_h, b_h)
    h_fast = jax.block_until_ready(h_fast)
    assert h_fast.shape == (batch, units)
    assert jnp.allclose(h_fast, h_ref, atol=5e-2, rtol=5e-2), (
        float(jnp.max(jnp.abs(h_fast - h_ref))))

    print("KERNEL_OK")
</pallas_src>

<mosaic_0001>
module attributes {stable_mosaic.version = 11 : i64} {
  func.func @minlstm_kernel(%arg0: i32, %arg1: memref<8x16xf32, #tpu.memory_space<vmem>>, %arg2: memref<8x128xf32, #tpu.memory_space<vmem>>, %arg3: memref<16x384xf32, #tpu.memory_space<vmem>>, %arg4: memref<1x384xf32, #tpu.memory_space<vmem>>, %arg5: memref<8x128xf32, #tpu.memory_space<vmem>>) attributes {dimension_semantics = [#tpu.dimension_semantics<parallel>], iteration_bounds = array<i64: 1>, scalar_prefetch = 0 : i64, scratch_operands = 0 : i64, tpu.core_type = #tpu.core_type<tc>, window_params = [{transform_indices = @transform_0, window_bounds = array<i64: 8, 16>}, {transform_indices = @transform_1, window_bounds = array<i64: 8, 128>}, {pipeline_mode = #tpu.pipeline_mode<synchronous>, transform_indices = @transform_2, window_bounds = array<i64: 16, 384>}, {pipeline_mode = #tpu.pipeline_mode<synchronous>, transform_indices = @transform_3, window_bounds = array<i64: 1, 384>}, {transform_indices = @transform_4, window_bounds = array<i64: 8, 128>}]} {
    %c0 = arith.constant 0 : index
    %c0_0 = arith.constant 0 : index
    %0 = vector.load %arg1[%c0, %c0_0] : memref<8x16xf32, #tpu.memory_space<vmem>>, vector<8x16xf32>
    %c0_1 = arith.constant 0 : index
    %c0_2 = arith.constant 0 : index
    %1 = vector.load %arg3[%c0_1, %c0_2] : memref<16x384xf32, #tpu.memory_space<vmem>>, vector<16x384xf32>
    %cst = arith.constant dense<0.000000e+00> : vector<8x384xf32>
    %2 = tpu.matmul %0, %1, %cst {dimension_numbers = #tpu.dot_dimension_numbers<[1], [0], [0], [1], [0, 0, 1, 1], [], []>} : vector<8x16xf32>, vector<16x384xf32>, vector<8x384xf32> -> vector<8x384xf32>
    %c0_3 = arith.constant 0 : index
    %c0_4 = arith.constant 0 : index
    %3 = vector.load %arg4[%c0_3, %c0_4] : memref<1x384xf32, #tpu.memory_space<vmem>>, vector<1x384xf32>
    %4 = vector.broadcast %3 : vector<1x384xf32> to vector<8x384xf32>
    %5 = arith.addf %2, %4 : vector<8x384xf32>
    %6 = vector.extract_strided_slice %5 {offsets = [0, 0], sizes = [8, 128], strides = [1, 1]} : vector<8x384xf32> to vector<8x128xf32>
    %7 = arith.negf %6 : vector<8x128xf32>
    %8 = math.exp %7 : vector<8x128xf32>
    %cst_5 = arith.constant 1.000000e+00 : f32
    %9 = vector.broadcast %cst_5 : f32 to vector<8x128xf32>
    %10 = arith.addf %9, %8 : vector<8x128xf32>
    %11 = arith.divf %9, %10 : vector<8x128xf32>
    %12 = vector.extract_strided_slice %5 {offsets = [0, 128], sizes = [8, 128], strides = [1, 1]} : vector<8x384xf32> to vector<8x128xf32>
    %13 = arith.negf %12 : vector<8x128xf32>
    %14 = math.exp %13 : vector<8x128xf32>
    %cst_6 = arith.constant 1.000000e+00 : f32
    %15 = vector.broadcast %cst_6 : f32 to vector<8x128xf32>
    %16 = arith.addf %15, %14 : vector<8x128xf32>
    %17 = arith.divf %15, %16 : vector<8x128xf32>
    %18 = vector.extract_strided_slice %5 {offsets = [0, 256], sizes = [8, 128], strides = [1, 1]} : vector<8x384xf32> to vector<8x128xf32>
    %19 = arith.addf %11, %17 : vector<8x128xf32>
    %cst_7 = arith.constant 1.000000e-30 : f32
    %20 = vector.broadcast %cst_7 : f32 to vector<8x128xf32>
    %21 = arith.maximumf %19, %20 : vector<8x128xf32>
    %cst_8 = arith.constant 1.000000e+00 : f32
    %22 = vector.broadcast %cst_8 : f32 to vector<8x128xf32>
    %23 = arith.divf %22, %21 : vector<8x128xf32>
    %24 = arith.mulf %11, %23 : vector<8x128xf32>
    %25 = arith.mulf %17, %23 : vector<8x128xf32>
    %c0_9 = arith.constant 0 : index
    %c0_10 = arith.constant 0 : index
    %26 = vector.load %arg2[%c0_9, %c0_10] : memref<8x128xf32, #tpu.memory_space<vmem>>, vector<8x128xf32>
    %27 = arith.mulf %24, %26 : vector<8x128xf32>
    %28 = arith.mulf %25, %18 : vector<8x128xf32>
    %29 = arith.addf %27, %28 : vector<8x128xf32>
    %c0_11 = arith.constant 0 : index
    %c0_12 = arith.constant 0 : index
    %30 = vector.load %arg5[%c0_11, %c0_12] : memref<8x128xf32, #tpu.memory_space<vmem>>, vector<8x128xf32>
    tpu.vector_store %arg5[%c0_11, %c0_12], %29 {strides = array<i32>} : memref<8x128xf32, #tpu.memory_space<vmem>>, vector<8x128xf32>,
    return
  }
  func.func @transform_0(%arg0: i32) -> (i32, i32) {
    %c0_i32 = arith.constant 0 : i32
    %c0_i32_0 = arith.constant 0 : i32
    return %arg0, %c0_i32 : i32, i32
  }
  func.func @transform_1(%arg0: i32) -> (i32, i32) {
    %c0_i32 = arith.constant 0 : i32
    %c0_i32_0 = arith.constant 0 : i32
    return %arg0, %c0_i32 : i32, i32
  }
  func.func @transform_2(%arg0: i32) -> (i32, i32) {
    %c0_i32 = arith.constant 0 : i32
    %c0_i32_0 = arith.constant 0 : i32
    %c0_i32_1 = arith.constant 0 : i32
    return %c0_i32, %c0_i32_0 : i32, i32
  }
  func.func @transform_3(%arg0: i32) -> (i32, i32) {
    %c0_i32 = arith.constant 0 : i32
    %c0_i32_0 = arith.constant 0 : i32
    %c0_i32_1 = arith.constant 0 : i32
    return %c0_i32, %c0_i32_0 : i32, i32
  }
  func.func @transform_4(%arg0: i32) -> (i32, i32) {
    %c0_i32 = arith.constant 0 : i32
    %c0_i32_0 = arith.constant 0 : i32
    return %arg0, %c0_i32 : i32, i32
  }
}

</mosaic_0001>

<llo_original>
// kernel: tpu_custom_call.1
$region0: #{tpu_custom_call.1}
  #allocation0 [shape = 'u32[]', space=smem, size = 0x4, offset = 0x4, fixed_abs, tag = 'smem constant byte address 0x4 - core index']
  #allocation1 [shape = 'u32[144,128]{1,0:T(1,128)}', space=vmem, size = 0x12000, scoped, tag = 'internal scratch']
  %s0 = inlined_call_operand.hbm [shape: f32[8,16], index: 0, kind: input, shape index: {}]
  %s1 = inlined_call_operand.hbm [shape: f32[8,128], index: 1, kind: input, shape index: {}]
  %s2 = inlined_call_operand.hbm [shape: f32[16,384], index: 2, kind: input, shape index: {}]
  %s3 = inlined_call_operand.vmem [shape: f32[1,384], index: 3, kind: input, shape index: {}]
  %s4 = inlined_call_operand.hbm [shape: f32[8,128], index: 4, kind: output, shape index: {}]
  %s5 = sld [smem:[#allocation0]]
  $region38: #{tpu_custom_call.1} parent=0
    _
  %s7 = ssub.s32 1, %s5
  %s8 = scalar_select 0, %s7, %s5
  $region1: #{tpu_custom_call.1} parent=0
    #allocation2 [shape = 'u8[4096]{0}', space=vmem, size = 0x1000, scoped, tag = 'input window, operand 0, single buffered']
    #allocation3 [shape = 's32[1]{0}', space=sflag, size = 0x4, scoped, tag = 'scoped memory for tpu_custom_call.1']
    #allocation4 [shape = 's32[1]{0}', space=sflag, size = 0x4, scoped, tag = 'scoped memory for tpu_custom_call.1']
    #allocation5 [shape = 'u8[4096]{0}', space=vmem, size = 0x1000, scoped, tag = 'input window, operand 1, single buffered']
    #allocation6 [shape = 's32[1]{0}', space=sflag, size = 0x4, scoped, tag = 'scoped memory for tpu_custom_call.1']
    #allocation7 [shape = 'u8[24576]{0}', space=vmem, size = 0x6000, scoped, tag = 'input window, operand 2, single buffered']
    #allocation8 [shape = 'u8[4096]{0}', space=vmem, size = 0x1000, scoped, tag = 'output window, operand 0, single buffered']
    %9 = vsyncpa [#allocation3], 0
    %10 = vsyncpa [#allocation6], 0
    %11 = vsyncpa [#allocation4], 0
    // Predicated region
    $region2: #{tpu_custom_call.1} parent=1 // pred_check
      _
    $region3: #{tpu_custom_call.1} parent=1 // pred_check_branch
      %13 = sbr.rel (0) target = $region5
    $region4: #{tpu_custom_call.1} parent=1 // pred_region
      %s15 = ssub.s32 128, 128
      %16 = vsyncadd [#allocation3], %s15
      %s18 = sshll.u32 [#allocation2], 4
      %s19 = int_to_ptr.vmem [resolvable:$true] %s18
      %21 = dma.hbm_to_vmem [thread:$0]  %s0, 128, %s19, [#allocation3]
    $region5: #{tpu_custom_call.1} parent=1 // pred_fallthru
      _
    // Predicated region
    $region6: #{tpu_custom_call.1} parent=1 // pred_check
      _
    $region7: #{tpu_custom_call.1} parent=1 // pred_check_branch
      %23 = sbr.rel (0) target = $region9
    $region8: #{tpu_custom_call.1} parent=1 // pred_region
      %s25 = ssub.s32 128, 128
      %26 = vsyncadd [#allocation6], %s25
      %s28 = sshll.u32 [#allocation5], 4
      %s29 = int_to_ptr.vmem [resolvable:$true] %s28
      %31 = dma.hbm_to_vmem [thread:$0]  %s1, 128, %s29, [#allocation6]
    $region9: #{tpu_custom_call.1} parent=1 // pred_fallthru
      _
    // Predicated region
    $region10: #{tpu_custom_call.1} parent=1 // pred_check
      _
    $region11: #{tpu_custom_call.1} parent=1 // pred_check_branch
      %33 = sbr.rel (0) target = $region13
    $region12: #{tpu_custom_call.1} parent=1 // pred_region
      %s35 = ssub.s32 768, 768
      %36 = vsyncadd [#allocation6], %s35
      %s37 = sshll.u32 [#allocation7], 4
      %s38 = int_to_ptr.vmem [resolvable:$true] %s37
      %43 = dma.hbm_to_vmem [thread:$0]  %s2, 768, %s38, [#allocation6], 384, 384, 24
    $region13: #{tpu_custom_call.1} parent=1 // pred_fallthru
      _
    // Predicated region
    $region14: #{tpu_custom_call.1} parent=1 // pred_check
      _
    $region15: #{tpu_custom_call.1} parent=1 // pred_check_branch
      %45 = sbr.rel (0) target = $region17
    $region16: #{tpu_custom_call.1} parent=1 // pred_region
      _
    $region17: #{tpu_custom_call.1} parent=1 // pred_fallthru
      _
    // Predicated region
    $region18: #{tpu_custom_call.1} parent=1 // pred_check
      _
    $region19: #{tpu_custom_call.1} parent=1 // pred_check_branch
      %47 = sbr.rel (0) target = $region21
    $region20: #{tpu_custom_call.1} parent=1 // pred_region
      %48 = dma.done [#allocation3], 128
    $region21: #{tpu_custom_call.1} parent=1 // pred_fallthru
      _
    // Predicated region
    $region22: #{tpu_custom_call.1} parent=1 // pred_check
      _
    $region23: #{tpu_custom_call.1} parent=1 // pred_check_branch
      %50 = sbr.rel (0) target = $region25
    $region24: #{tpu_custom_call.1} parent=1 // pred_region
      %51 = dma.done [#allocation6], 128
    $region25: #{tpu_custom_call.1} parent=1 // pred_fallthru
      _
    // Predicated region
    $region26: #{tpu_custom_call.1} parent=1 // pred_check
      _
    $region27: #{tpu_custom_call.1} parent=1 // pred_check_branch
      %53 = sbr.rel (0) target = $region29
    $region28: #{tpu_custom_call.1} parent=1 // pred_region
      %54 = dma.done [#allocation6], 768
    $region29: #{tpu_custom_call.1} parent=1 // pred_fallthru
      _
    %v55 = vld [vmem:[#allocation2] sm:$0xff]
    %v56 = vld [vmem:[#allocation7] sm:$0xff]
    %v57 = vld [vmem:[#allocation7 + $0x8] sm:$0xff]
    %v58 = vld [vmem:[#allocation7 + $0x10] sm:$0xff]
    %v59 = vld [vmem:[#allocation7 + $0x18] sm:$0xff]
    %v60 = vld [vmem:[#allocation7 + $0x20] sm:$0xff]
    %v61 = vld [vmem:[#allocation7 + $0x28] sm:$0xff]
    %v62 = vld [vmem:[%s3] sm:$0x7]
    %v64 = vlaneseq
    %v65 = vshrl.u32 %v64, 7
    %v66 = vsub.s32 0, %v65
    %v67 = vrot.slane %v62, %v66
    %v68 = vlaneseq
    %v69 = vshrl.u32 %v68, 7
    %v70 = vsub.s32 1, %v69
    %v71 = vrot.slane %v62, %v70
    %v72 = vlaneseq
    %v73 = vshrl.u32 %v72, 7
    %v74 = vsub.s32 2, %v73
    %v75 = vrot.slane %v62, %v74
    %vm79 = vcmask 130048
    %v81 = vsel %vm79, %v55, 0
    %83 = vmatprep.subr.mxu0 %v57
    %84 = vmatpush1.msra.mxu0 %v56
    %85 = vmatprep.subr.mxu0 %v60
    %86 = vmatpush1.msra.mxu0 %v59
    %87 = vmatprep.subr.mxu0 0.0
    %88 = vmatpush1.msra.mxu0 0.0
    %89 = vmatprep.subr.mxu0 0.0
    %90 = vmatpush1.msra.mxu0 0.0
    %91 = vmatprep.subr.mxu0 0.0
    %92 = vmatpush1.msra.mxu0 0.0
    %93 = vmatprep.subr.mxu0 0.0
    %94 = vmatpush1.msra.mxu0 0.0
    %95 = vmatprep.subr.mxu0 0.0
    %96 = vmatpush1.msra.mxu0 0.0
    %97 = vmatprep.subr.mxu0 0.0
    %98 = vmatpush1.msra.mxu0 0.0
    %99 = vmatprep.subr.mxu0 0.0
    %100 = vmatpush1.msra.mxu0 0.0
    %101 = vmatprep.subr.mxu0 0.0
    %102 = vmatpush1.msra.mxu0 0.0
    %103 = vmatprep.subr.mxu0 0.0
    %104 = vmatpush1.msra.mxu0 0.0
    %105 = vmatprep.subr.mxu0 0.0
    %106 = vmatpush1.msra.mxu0 0.0
    %107 = vmatprep.subr.mxu0 0.0
    %108 = vmatpush1.msra.mxu0 0.0
    %109 = vmatprep.subr.mxu0 0.0
    %110 = vmatpush1.msra.mxu0 0.0
    %111 = vmatprep.subr.mxu0 0.0
    %112 = vmatpush1.msra.mxu0 0.0
    %113 = vmatprep.subr.mxu0 0.0
    %114 = vmatpush1.msra.mxu0 0.0
    %115 = vmatprep.subr.mxu0 0.0
    %116 = vmatpush1.msra.mxu0 0.0
    %117 = vmatprep.subr.mxu0 0.0
    %118 = vmatpush1.msra.mxu0 0.0
    %119 = vmatprep.subr.mxu0 0.0
    %120 = vmatpush1.msra.mxu0 0.0
    %121 = vmatprep.subr.mxu0 0.0
    %122 = vmatpush1.msra.mxu0 0.0
    %123 = vmatprep.subr.mxu0 0.0
    %124 = vmatpush1.msra.mxu0 0.0
    %125 = vmatprep.subr.mxu0 0.0
    %126 = vmatpush1.msra.mxu0 0.0
    %127 = vmatprep.subr.mxu0 0.0
    %128 = vmatpush1.msra.mxu0 0.0
    %129 = vmatprep.subr.mxu0 0.0
    %130 = vmatpush1.msra.mxu0 0.0
    %131 = vmatprep.subr.mxu0 0.0
    %132 = vmatpush1.msra.mxu0 0.0
    %133 = vmatprep.subr.mxu0 0.0
    %134 = vmatpush1.msra.mxu0 0.0
    %135 = vmatprep.subr.mxu0 0.0
    %136 = vmatpush1.msra.mxu0 0.0
    %137 = vmatprep.subr.mxu0 0.0
    %138 = vmatpush1.msra.mxu0 0.0
    %139 = vmatprep.subr.mxu0 0.0
    %140 = vmatpush1.msra.mxu0 0.0
    %141 = vmatprep.subr.mxu0 0.0
    %142 = vmatpush1.msra.mxu0 0.0
    %143 = vmatprep.subr.mxu0 0.0
    %144 = vmatpush1.msra.mxu0 0.0
    %145 = vmatprep.subr.mxu0 0.0
    %146 = vmatpush1.msra.mxu0 0.0
    %147 = vmatprep.mubr.f32.mxu0 0.0
    %148 = vmatmul.mubr.f32.gmra.mrb[0].mxu0 %v81
    %v149 = vpop.f32.mrb[0].mxu0
    %v150 = vadd.f32 %v67, %v149
    %v151 = vpop.f32.mrb[0].mxu0
    %v152 = vadd.f32 %v71, %v151
    %153 = vdwg.mxu0
    %154 = vmatprep.subr.mxu0 0.0
    %155 = vmatpush1.msra.mxu0 %v58
    %156 = vmatprep.subr.mxu0 0.0
    %157 = vmatpush1.msra.mxu0 %v61
    %158 = vmatprep.subr.mxu0 0.0
    %159 = vmatpush1.msra.mxu0 0.0
    %160 = vmatprep.subr.mxu0 0.0
    %161 = vmatpush1.msra.mxu0 0.0
    %162 = vmatprep.subr.mxu0 0.0
    %163 = vmatpush1.msra.mxu0 0.0
    %164 = vmatprep.subr.mxu0 0.0
    %165 = vmatpush1.msra.mxu0 0.0
    %166 = vmatprep.subr.mxu0 0.0
    %167 = vmatpush1.msra.mxu0 0.0
    %168 = vmatprep.subr.mxu0 0.0
    %169 = vmatpush1.msra.mxu0 0.0
    %170 = vmatprep.subr.mxu0 0.0
    %171 = vmatpush1.msra.mxu0 0.0
    %172 = vmatprep.subr.mxu0 0.0
    %173 = vmatpush1.msra.mxu0 0.0
    %174 = vmatprep.subr.mxu0 0.0
    %175 = vmatpush1.msra.mxu0 0.0
    %176 = vmatprep.subr.mxu0 0.0
    %177 = vmatpush1.msra.mxu0 0.0
    %178 = vmatprep.subr.mxu0 0.0
    %179 = vmatpush1.msra.mxu0 0.0
    %180 = vmatprep.subr.mxu0 0.0
    %181 = vmatpush1.msra.mxu0 0.0
    %182 = vmatprep.subr.mxu0 0.0
    %183 = vmatpush1.msra.mxu0 0.0
    %184 = vmatprep.subr.mxu0 0.0
    %185 = vmatpush1.msra.mxu0 0.0
    %186 = vmatprep.subr.mxu0 0.0
    %187 = vmatpush1.msra.mxu0 0.0
    %188 = vmatprep.subr.mxu0 0.0
    %189 = vmatpush1.msra.mxu0 0.0
    %190 = vmatprep.subr.mxu0 0.0
    %191 = vmatpush1.msra.mxu0 0.0
    %192 = vmatprep.subr.mxu0 0.0
    %193 = vmatpush1.msra.mxu0 0.0
    %194 = vmatprep.subr.mxu0 0.0
    %195 = vmatpush1.msra.mxu0 0.0
    %196 = vmatprep.subr.mxu0 0.0
    %197 = vmatpush1.msra.mxu0 0.0
    %198 = vmatprep.subr.mxu0 0.0
    %199 = vmatpush1.msra.mxu0 0.0
    %200 = vmatprep.subr.mxu0 0.0
    %201 = vmatpush1.msra.mxu0 0.0
    %202 = vmatprep.subr.mxu0 0.0
    %203 = vmatpush1.msra.mxu0 0.0
    %204 = vmatprep.subr.mxu0 0.0
    %205 = vmatpush1.msra.mxu0 0.0
    %206 = vmatprep.subr.mxu0 0.0
    %207 = vmatpush1.msra.mxu0 0.0
    %208 = vmatprep.subr.mxu0 0.0
    %209 = vmatpush1.msra.mxu0 0.0
    %210 = vmatprep.subr.mxu0 0.0
    %211 = vmatpush1.msra.mxu0 0.0
    %212 = vmatprep.subr.mxu0 0.0
    %213 = vmatpush1.msra.mxu0 0.0
    %214 = vmatprep.subr.mxu0 0.0
    %215 = vmatpush1.msra.mxu0 0.0
    %216 = vmatprep.subr.mxu0 0.0
    %217 = vmatpush1.msra.mxu0 0.0
    %218 = vmatprep.mubr.f32.mxu0 0.0
    %219 = vmatmul.mubr.f32.gmra.mrb[0].mxu0 %v81
    %v220 = vpop.f32.mrb[0].mxu0
    %v221 = vadd.f32 %v75, %v220
    %v222 = vpop.f32.mrb[0].mxu0
    %223 = vdwg.mxu0
    %v224 = vxor.u32 %v150, 2147483648
    %v225 = vmul.f32 %v224, 1.442695
    %v226 = vpow.pop %v225
    %v227 = vadd.f32 %v226, 1.0
    %v228 = vrcp.pop %v227
    %v229 = vmul.f32 1.0, %v228
    %v230 = vxor.u32 %v152, 2147483648
    %v231 = vmul.f32 %v230, 1.442695
    %v232 = vpow.pop %v231
    %v233 = vadd.f32 %v232, 1.0
    %v234 = vrcp.pop %v233
    %v235 = vmul.f32 1.0, %v234
    %v236 = vadd.f32 %v229, %v235
    %v237 = vmax.f32 %v236, 1e-30
    %v238 = vrcp.pop %v237
    %v239 = vmul.f32 1.0, %v238
    %v240 = vmul.f32 %v229, %v239
    %v241 = vmul.f32 %v235, %v239
    %v242 = vld [vmem:[#allocation5] sm:$0xff]
    %v243 = vmul.f32 %v240, %v242
    %v244 = vmul.f32 %v241, %v221
    %v245 = vadd.f32 %v243, %v244
    %246 = vst [vmem:[#allocation8] sm:$0xff] %v245
    // Predicated region
    $region30: #{tpu_custom_call.1} parent=1 // pred_check
      _
    $region31: #{tpu_custom_call.1} parent=1 // pred_check_branch
      %248 = sbr.rel (0) target = $region33
    $region32: #{tpu_custom_call.1} parent=1 // pred_region
      %s250 = ssub.s32 128, 128
      %251 = vsyncadd [#allocation4], %s250
      %s253 = sshll.u32 [#allocation8], 4
      %s254 = int_to_ptr.vmem [resolvable:$true] %s253
      %256 = dma.vmem_to_hbm [thread:$0]  %s254, 128, %s4, [#allocation4]
    $region33: #{tpu_custom_call.1} parent=1 // pred_fallthru
      _
    // Predicated region
    $region34: #{tpu_custom_call.1} parent=1 // pred_check
      _
    $region35: #{tpu_custom_call.1} parent=1 // pred_check_branch
      %258 = sbr.rel (0) target = $region37
    $region36: #{tpu_custom_call.1} parent=1 // pred_region
      %259 = dma.done [#allocation4], 128
    $region37: #{tpu_custom_call.1} parent=1 // pred_fallthru
      _
    %260 = vsyncpa [#allocation3], 1
    %261 = vsyncpa [#allocation6], 1
    %262 = vsyncpa [#allocation4], 1

</llo_original>
